<compile_context>
chip_gen: v6e
topology: v6e:2x2x1
jax: 0.10.0
libtpu: 0.0.40
codegen_flags: <defaults>
</compile_context>

<pallas_src>
import functools

import jax
import jax.numpy as jnp
from jax.experimental import pallas as pl
from jax.experimental.pallas import tpu as pltpu


# --------------------------------------------------------------------------
# Kernel
# --------------------------------------------------------------------------
def _coupling_fused_kernel(x_ref, w_ref, b_ref, out_ref, *, D, H):
    """Fused s/t forward.

    layer 0   : x(TB,D)  @ W[0,:D ,:2H]              -> ReLU
    layers1-3 : h(TB,2H) @ W[i,:2H,:2H] (block-diag) -> ReLU
    layer 4   : h(TB,2H) @ W[4,:2H,:2D] (block-diag) -> [s_pre | t]
    tanh is applied to the first D output lanes only (the s half).
    """
    H2, D2 = 2 * H, 2 * D

    x = x_ref[...]          # (TB, D)
    w = w_ref[...]          # (5, P, P) packed + zero-padded weights (tiny)
    b = b_ref[...]          # (5, P)    packed + zero-padded biases

    def linear(h, li, k_in, n_out):
        return (
            jnp.dot(h, w[li, :k_in, :n_out],
                    preferred_element_type=jnp.float32)
            + b[li:li + 1, :n_out]
        )

    h = jnp.maximum(linear(x, 0, D, H2), 0.0)
    for li in (1, 2, 3):
        h = jnp.maximum(linear(h, li, H2, H2), 0.0)
    y = linear(h, 4, H2, D2)                     # (TB, 2D): [s_pre | t]

    # tanh only on the s half; select with a lane mask (avoids slice+concat).
    col = jax.lax.broadcasted_iota(jnp.int32, y.shape, 1)
    out = jnp.where(col < D, jnp.tanh(y), y)
    out_ref[...] = out.astype(out_ref.dtype)


# --------------------------------------------------------------------------
# Parameter construction / packing
# --------------------------------------------------------------------------
def init_coupling_params(key, input_dim, hidden_dim, dtype=jnp.float32):
    """Deterministic synthetic params. Weights stored [in, out]."""
    dims = [input_dim] + [hidden_dim] * 4 + [input_dim]
    params = []
    for _branch in range(2):  # 0 = s_layer, 1 = t_layer
        for li in range(5):
            d_in, d_out = dims[li], dims[li + 1]
            key, kw, kb = jax.random.split(key, 3)
            bound = 1.0 / jnp.sqrt(d_in)
            w = jax.random.uniform(kw, (d_in, d_out), dtype, -bound, bound)
            b = jax.random.uniform(kb, (1, d_out), dtype, -bound, bound)
            params.append(w)
            params.append(b)
    return params  # 20 arrays: [sw0,sb0,...,sw4,sb4, tw0,tb0,...,tw4,tb4]


def pack_coupling_params(params, input_dim, hidden_dim, dtype=jnp.float32):
    """Pack 20 arrays into one [5,P,P] weight tensor + one [5,P] bias tensor.

    layer 0 : concat([sw0, tw0], axis=1)            -> [D , 2H]
    layer1-3: block_diag(sw_i, tw_i)                -> [2H, 2H]
    layer 4 : block_diag(sw4, tw4)                  -> [2H, 2D]
    Everything zero-padded into a common square P = max(2H, 2D, D).
    """
    D, H = input_dim, hidden_dim
    H2, D2 = 2 * H, 2 * D
    P = max(H2, D2, D)
    s_params, t_params = params[:10], params[10:]

    def block_diag(a, bb):
        ra, ca = a.shape
        rb, cb = bb.shape
        top = jnp.concatenate([a, jnp.zeros((ra, cb), dtype)], axis=1)
        bot = jnp.concatenate([jnp.zeros((rb, ca), dtype), bb], axis=1)
        return jnp.concatenate([top, bot], axis=0)

    Wp = jnp.zeros((5, P, P), dtype)
    bp = jnp.zeros((5, P), dtype)
    for li in range(5):
        sw, sb = s_params[2 * li], s_params[2 * li + 1]
        tw, tb = t_params[2 * li], t_params[2 * li + 1]
        if li == 0:
            w = jnp.concatenate([sw, tw], axis=1)        # [D, 2H]
        else:
            w = block_diag(sw, tw)                       # [2H, 2H] / [2H, 2D]
        b = jnp.concatenate([sb, tb], axis=1)            # [1, 2H] / [1, 2D]
        Wp = Wp.at[li, : w.shape[0], : w.shape[1]].set(w)
        bp = bp.at[li, : b.shape[1]].set(b[0])
    return Wp, bp


# --------------------------------------------------------------------------
# Wrapper
# --------------------------------------------------------------------------
def _pick_batch_tile(B):
    for tb in (512, 256, 128):
        if B % tb == 0:
            return tb
    return B  # small batch: single tile / single grid step


def coupling_layer_forward(x, w_packed, b_packed, input_dim, hidden_dim):
    B, D = x.shape
    assert D == input_dim
    D2 = 2 * D
    P = w_packed.shape[-1]

    TB = _pick_batch_tile(B)
    grid = (B // TB,)

    kernel = functools.partial(_coupling_fused_kernel, D=D, H=hidden_dim)
    out = pl.pallas_call(
        kernel,
        out_shape=jax.ShapeDtypeStruct((B, D2), x.dtype),
        grid=grid,
        in_specs=[
            pl.BlockSpec((TB, D), lambda i: (i, 0)),          # x tile
            pl.BlockSpec((5, P, P), lambda i: (0, 0, 0)),     # weights (pinned)
            pl.BlockSpec((5, P), lambda i: (0, 0)),           # biases (pinned)
        ],
        out_specs=pl.BlockSpec((TB, D2), lambda i: (i, 0)),   # [s | t] combined
        compiler_params=pltpu.CompilerParams(
            dimension_semantics=("parallel",)),
    )(x, w_packed, b_packed)

    # TODO(synk): cast matmuls to bf16 on v6e/v7x once hidden_dim/batch scale up.
    return out[:, :D], out[:, D:]


# --------------------------------------------------------------------------
# Pure-JAX reference (un-fused, matches the PyTorch module exactly)
# --------------------------------------------------------------------------
def _reference_forward(x, params):
    s_params, t_params = params[:10], params[10:]

    def mlp(xx, p, final_tanh):
        h = xx
        for li in range(5):
            w, b = p[2 * li], p[2 * li + 1]
            h = h @ w + b
            if li < 4:
                h = jnp.maximum(h, 0.0)
        return jnp.tanh(h) if final_tanh else h

    return mlp(x, s_params, True), mlp(x, t_params, False)


if __name__ == "__main__":
    batch, input_dim, hidden_dim = 8, 16, 32

    key = jax.random.PRNGKey(0)
    key, kx = jax.random.split(key)
    x = jax.random.normal(kx, (batch, input_dim), dtype=jnp.float32)
    params = init_coupling_params(key, input_dim, hidden_dim)
    w_packed, b_packed = pack_coupling_params(params, input_dim, hidden_dim)

    s, t = coupling_layer_forward(x, w_packed, b_packed, input_dim, hidden_dim)
    jax.block_until_ready((s, t))

    s_ref, t_ref = _reference_forward(x, params)
    assert s.shape == (batch, input_dim) and t.shape == (batch, input_dim)
    assert jnp.allclose(s, s_ref, atol=1e-4, rtol=1e-4), \
        float(jnp.max(jnp.abs(s - s_ref)))
    assert jnp.allclose(t, t_ref, atol=1e-4, rtol=1e-4), \
        float(jnp.max(jnp.abs(t - t_ref)))

    print("KERNEL_OK")
</pallas_src>

<mosaic_0001>
module attributes {stable_mosaic.version = 11 : i64} {
  func.func @_coupling_fused_kernel(%arg0: i32, %arg1: memref<8x16xf32, #tpu.memory_space<vmem>>, %arg2: memref<5x64x64xf32, #tpu.memory_space<vmem>>, %arg3: memref<5x64xf32, #tpu.memory_space<vmem>>, %arg4: memref<8x32xf32, #tpu.memory_space<vmem>>) attributes {dimension_semantics = [#tpu.dimension_semantics<parallel>], iteration_bounds = array<i64: 1>, scalar_prefetch = 0 : i64, scratch_operands = 0 : i64, tpu.core_type = #tpu.core_type<tc>, window_params = [{transform_indices = @transform_0, window_bounds = array<i64: 8, 16>}, {pipeline_mode = #tpu.pipeline_mode<synchronous>, transform_indices = @transform_1, window_bounds = array<i64: 5, 64, 64>}, {pipeline_mode = #tpu.pipeline_mode<synchronous>, transform_indices = @transform_2, window_bounds = array<i64: 5, 64>}, {transform_indices = @transform_3, window_bounds = array<i64: 8, 32>}]} {
    %c0 = arith.constant 0 : index
    %c0_0 = arith.constant 0 : index
    %0 = vector.load %arg1[%c0, %c0_0] : memref<8x16xf32, #tpu.memory_space<vmem>>, vector<8x16xf32>
    %c0_1 = arith.constant 0 : index
    %c0_2 = arith.constant 0 : index
    %c0_3 = arith.constant 0 : index
    %1 = vector.load %arg2[%c0_1, %c0_2, %c0_3] : memref<5x64x64xf32, #tpu.memory_space<vmem>>, vector<5x64x64xf32>
    %c0_4 = arith.constant 0 : index
    %c0_5 = arith.constant 0 : index
    %2 = vector.load %arg3[%c0_4, %c0_5] : memref<5x64xf32, #tpu.memory_space<vmem>>, vector<5x64xf32>
    %3 = vector.extract_strided_slice %1 {offsets = [0, 0, 0], sizes = [1, 16, 64], strides = [1, 1, 1]} : vector<5x64x64xf32> to vector<1x16x64xf32>
    %4 = vector.shape_cast %3 : vector<1x16x64xf32> to vector<16x64xf32>
    %cst = arith.constant dense<0.000000e+00> : vector<8x64xf32>
    %5 = tpu.matmul %0, %4, %cst {dimension_numbers = #tpu.dot_dimension_numbers<[1], [0], [0], [1], [0, 0, 1, 1], [], []>} : vector<8x16xf32>, vector<16x64xf32>, vector<8x64xf32> -> vector<8x64xf32>
    %6 = vector.extract_strided_slice %2 {offsets = [0, 0], sizes = [1, 64], strides = [1, 1]} : vector<5x64xf32> to vector<1x64xf32>
    %7 = vector.broadcast %6 : vector<1x64xf32> to vector<8x64xf32>
    %8 = arith.addf %5, %7 : vector<8x64xf32>
    %cst_6 = arith.constant 0.000000e+00 : f32
    %9 = vector.broadcast %cst_6 : f32 to vector<8x64xf32>
    %10 = arith.maximumf %8, %9 : vector<8x64xf32>
    %11 = vector.extract_strided_slice %1 {offsets = [1, 0, 0], sizes = [1, 64, 64], strides = [1, 1, 1]} : vector<5x64x64xf32> to vector<1x64x64xf32>
    %12 = vector.shape_cast %11 : vector<1x64x64xf32> to vector<64x64xf32>
    %cst_7 = arith.constant dense<0.000000e+00> : vector<8x64xf32>
    %13 = tpu.matmul %10, %12, %cst_7 {dimension_numbers = #tpu.dot_dimension_numbers<[1], [0], [0], [1], [0, 0, 1, 1], [], []>} : vector<8x64xf32>, vector<64x64xf32>, vector<8x64xf32> -> vector<8x64xf32>
    %14 = vector.extract_strided_slice %2 {offsets = [1, 0], sizes = [1, 64], strides = [1, 1]} : vector<5x64xf32> to vector<1x64xf32>
    %15 = vector.broadcast %14 : vector<1x64xf32> to vector<8x64xf32>
    %16 = arith.addf %13, %15 : vector<8x64xf32>
    %cst_8 = arith.constant 0.000000e+00 : f32
    %17 = vector.broadcast %cst_8 : f32 to vector<8x64xf32>
    %18 = arith.maximumf %16, %17 : vector<8x64xf32>
    %19 = vector.extract_strided_slice %1 {offsets = [2, 0, 0], sizes = [1, 64, 64], strides = [1, 1, 1]} : vector<5x64x64xf32> to vector<1x64x64xf32>
    %20 = vector.shape_cast %19 : vector<1x64x64xf32> to vector<64x64xf32>
    %cst_9 = arith.constant dense<0.000000e+00> : vector<8x64xf32>
    %21 = tpu.matmul %18, %20, %cst_9 {dimension_numbers = #tpu.dot_dimension_numbers<[1], [0], [0], [1], [0, 0, 1, 1], [], []>} : vector<8x64xf32>, vector<64x64xf32>, vector<8x64xf32> -> vector<8x64xf32>
    %22 = vector.extract_strided_slice %2 {offsets = [2, 0], sizes = [1, 64], strides = [1, 1]} : vector<5x64xf32> to vector<1x64xf32>
    %23 = vector.broadcast %22 : vector<1x64xf32> to vector<8x64xf32>
    %24 = arith.addf %21, %23 : vector<8x64xf32>
    %cst_10 = arith.constant 0.000000e+00 : f32
    %25 = vector.broadcast %cst_10 : f32 to vector<8x64xf32>
    %26 = arith.maximumf %24, %25 : vector<8x64xf32>
    %27 = vector.extract_strided_slice %1 {offsets = [3, 0, 0], sizes = [1, 64, 64], strides = [1, 1, 1]} : vector<5x64x64xf32> to vector<1x64x64xf32>
    %28 = vector.shape_cast %27 : vector<1x64x64xf32> to vector<64x64xf32>
    %cst_11 = arith.constant dense<0.000000e+00> : vector<8x64xf32>
    %29 = tpu.matmul %26, %28, %cst_11 {dimension_numbers = #tpu.dot_dimension_numbers<[1], [0], [0], [1], [0, 0, 1, 1], [], []>} : vector<8x64xf32>, vector<64x64xf32>, vector<8x64xf32> -> vector<8x64xf32>
    %30 = vector.extract_strided_slice %2 {offsets = [3, 0], sizes = [1, 64], strides = [1, 1]} : vector<5x64xf32> to vector<1x64xf32>
    %31 = vector.broadcast %30 : vector<1x64xf32> to vector<8x64xf32>
    %32 = arith.addf %29, %31 : vector<8x64xf32>
    %cst_12 = arith.constant 0.000000e+00 : f32
    %33 = vector.broadcast %cst_12 : f32 to vector<8x64xf32>
    %34 = arith.maximumf %32, %33 : vector<8x64xf32>
    %35 = vector.extract_strided_slice %1 {offsets = [4, 0, 0], sizes = [1, 64, 32], strides = [1, 1, 1]} : vector<5x64x64xf32> to vector<1x64x32xf32>
    %36 = vector.shape_cast %35 : vector<1x64x32xf32> to vector<64x32xf32>
    %cst_13 = arith.constant dense<0.000000e+00> : vector<8x32xf32>
    %37 = tpu.matmul %34, %36, %cst_13 {dimension_numbers = #tpu.dot_dimension_numbers<[1], [0], [0], [1], [0, 0, 1, 1], [], []>} : vector<8x64xf32>, vector<64x32xf32>, vector<8x32xf32> -> vector<8x32xf32>
    %38 = vector.extract_strided_slice %2 {offsets = [4, 0], sizes = [1, 32], strides = [1, 1]} : vector<5x64xf32> to vector<1x32xf32>
    %39 = vector.broadcast %38 : vector<1x32xf32> to vector<8x32xf32>
    %40 = arith.addf %37, %39 : vector<8x32xf32>
    %41 = tpu.iota {dimensions = array<i32: 1>} : vector<8x32xi32>
    %c16_i32 = arith.constant 16 : i32
    %42 = vector.broadcast %c16_i32 : i32 to vector<8x32xi32>
    %43 = arith.cmpi slt, %41, %42 : vector<8x32xi32>
    %44 = math.tanh %40 : vector<8x32xf32>
    %45 = arith.select %43, %44, %40 : vector<8x32xi1>, vector<8x32xf32>
    %c0_14 = arith.constant 0 : index
    %c0_15 = arith.constant 0 : index
    %46 = vector.load %arg4[%c0_14, %c0_15] : memref<8x32xf32, #tpu.memory_space<vmem>>, vector<8x32xf32>
    tpu.vector_store %arg4[%c0_14, %c0_15], %45 {strides = array<i32>} : memref<8x32xf32, #tpu.memory_space<vmem>>, vector<8x32xf32>,
    return
  }
  func.func @transform_0(%arg0: i32) -> (i32, i32) {
    %c0_i32 = arith.constant 0 : i32
    %c0_i32_0 = arith.constant 0 : i32
    return %arg0, %c0_i32 : i32, i32
  }
  func.func @transform_1(%arg0: i32) -> (i32, i32, i32) {
    %c0_i32 = arith.constant 0 : i32
    %c0_i32_0 = arith.constant 0 : i32
    %c0_i32_1 = arith.constant 0 : i32
    %c0_i32_2 = arith.constant 0 : i32
    return %c0_i32, %c0_i32_0, %c0_i32_1 : i32, i32, i32
  }
  func.func @transform_2(%arg0: i32) -> (i32, i32) {
    %c0_i32 = arith.constant 0 : i32
    %c0_i32_0 = arith.constant 0 : i32
    %c0_i32_1 = arith.constant 0 : i32
    return %c0_i32, %c0_i32_0 : i32, i32
  }
  func.func @transform_3(%arg0: i32) -> (i32, i32) {
    %c0_i32 = arith.constant 0 : i32
    %c0_i32_0 = arith.constant 0 : i32
    return %arg0, %c0_i32 : i32, i32
  }
}

</mosaic_0001>

<llo_original>
// kernel: tpu_custom_call.1
$region0: #{tpu_custom_call.1}
  #allocation0 [shape = 'u32[]', space=smem, size = 0x4, offset = 0x4, fixed_abs, tag = 'smem constant byte address 0x4 - core index']
  #allocation1 [shape = 'u32[144,128]{1,0:T(1,128)}', space=vmem, size = 0x12000, scoped, tag = 'internal scratch']
  %s0 = inlined_call_operand.hbm [shape: f32[8,16], index: 0, kind: input, shape index: {}]
  %s1 = inlined_call_operand.hbm [shape: f32[5,64,64], index: 1, kind: input, shape index: {}]
  %s2 = inlined_call_operand.hbm [shape: f32[5,64], index: 2, kind: input, shape index: {}]
  %s3 = inlined_call_operand.hbm [shape: f32[8,32], index: 3, kind: output, shape index: {}]
  %s4 = sld [smem:[#allocation0]]
  $region34: #{tpu_custom_call.1} parent=0
    _
  %s6 = ssub.s32 1, %s4
  %s7 = scalar_select 0, %s6, %s4
  $region1: #{tpu_custom_call.1} parent=0
    #allocation2 [shape = 'u8[4096]{0}', space=vmem, size = 0x1000, scoped, tag = 'input window, operand 0, single buffered']
    #allocation3 [shape = 's32[1]{0}', space=sflag, size = 0x4, scoped, tag = 'scoped memory for tpu_custom_call.1']
    #allocation4 [shape = 's32[1]{0}', space=sflag, size = 0x4, scoped, tag = 'scoped memory for tpu_custom_call.1']
    #allocation5 [shape = 'u8[163840]{0}', space=vmem, size = 0x28000, scoped, tag = 'input window, operand 1, single buffered']
    #allocation6 [shape = 's32[1]{0}', space=sflag, size = 0x4, scoped, tag = 'scoped memory for tpu_custom_call.1']
    #allocation7 [shape = 'u8[4096]{0}', space=vmem, size = 0x1000, scoped, tag = 'input window, operand 2, single buffered']
    #allocation8 [shape = 'u8[4096]{0}', space=vmem, size = 0x1000, scoped, tag = 'output window, operand 0, single buffered']
    %8 = vsyncpa [#allocation3], 0
    %9 = vsyncpa [#allocation6], 0
    %10 = vsyncpa [#allocation4], 0
    // Predicated region
    $region2: #{tpu_custom_call.1} parent=1 // pred_check
      _
    $region3: #{tpu_custom_call.1} parent=1 // pred_check_branch
      %12 = sbr.rel (0) target = $region5
    $region4: #{tpu_custom_call.1} parent=1 // pred_region
      %s14 = ssub.s32 128, 128
      %15 = vsyncadd [#allocation3], %s14
      %s17 = sshll.u32 [#allocation2], 4
      %s18 = int_to_ptr.vmem [resolvable:$true] %s17
      %20 = dma.hbm_to_vmem [thread:$0]  %s0, 128, %s18, [#allocation3]
    $region5: #{tpu_custom_call.1} parent=1 // pred_fallthru
      _
    // Predicated region
    $region6: #{tpu_custom_call.1} parent=1 // pred_check
      _
    $region7: #{tpu_custom_call.1} parent=1 // pred_check_branch
      %22 = sbr.rel (0) target = $region9
    $region8: #{tpu_custom_call.1} parent=1 // pred_region
      %s24 = ssub.s32 5120, 5120
      %25 = vsyncadd [#allocation6], %s24
      %s26 = sshll.u32 [#allocation5], 4
      %s27 = int_to_ptr.vmem [resolvable:$true] %s26
      %32 = dma.hbm_to_vmem [thread:$0]  %s1, 5120, %s27, [#allocation6], 128, 128, 8
    $region9: #{tpu_custom_call.1} parent=1 // pred_fallthru
      _
    // Predicated region
    $region10: #{tpu_custom_call.1} parent=1 // pred_check
      _
    $region11: #{tpu_custom_call.1} parent=1 // pred_check_branch
      %34 = sbr.rel (0) target = $region13
    $region12: #{tpu_custom_call.1} parent=1 // pred_region
      %s36 = ssub.s32 128, 128
      %37 = vsyncadd [#allocation6], %s36
      %s39 = sshll.u32 [#allocation7], 4
      %s40 = int_to_ptr.vmem [resolvable:$true] %s39
      %42 = dma.hbm_to_vmem [thread:$0]  %s2, 128, %s40, [#allocation6]
    $region13: #{tpu_custom_call.1} parent=1 // pred_fallthru
      _
    // Predicated region
    $region14: #{tpu_custom_call.1} parent=1 // pred_check
      _
    $region15: #{tpu_custom_call.1} parent=1 // pred_check_branch
      %44 = sbr.rel (0) target = $region17
    $region16: #{tpu_custom_call.1} parent=1 // pred_region
      %45 = dma.done [#allocation3], 128
    $region17: #{tpu_custom_call.1} parent=1 // pred_fallthru
      _
    // Predicated region
    $region18: #{tpu_custom_call.1} parent=1 // pred_check
      _
    $region19: #{tpu_custom_call.1} parent=1 // pred_check_branch
      %47 = sbr.rel (0) target = $region21
    $region20: #{tpu_custom_call.1} parent=1 // pred_region
      %48 = dma.done [#allocation6], 5120
    $region21: #{tpu_custom_call.1} parent=1 // pred_fallthru
      _
    // Predicated region
    $region22: #{tpu_custom_call.1} parent=1 // pred_check
      _
    $region23: #{tpu_custom_call.1} parent=1 // pred_check_branch
      %50 = sbr.rel (0) target = $region25
    $region24: #{tpu_custom_call.1} parent=1 // pred_region
      %51 = dma.done [#allocation6], 128
    $region25: #{tpu_custom_call.1} parent=1 // pred_fallthru
      _
    %v52 = vld [vmem:[#allocation2] sm:$0xff]
    %v53 = vld [vmem:[#allocation5] sm:$0xff]
    %v54 = vld [vmem:[#allocation5 + $0x8] sm:$0xff]
    %v55 = vld [vmem:[#allocation5 + $0x40] sm:$0xff]
    %v56 = vld [vmem:[#allocation5 + $0x48] sm:$0xff]
    %v57 = vld [vmem:[#allocation5 + $0x50] sm:$0xff]
    %v58 = vld [vmem:[#allocation5 + $0x58] sm:$0xff]
    %v59 = vld [vmem:[#allocation5 + $0x60] sm:$0xff]
    %v60 = vld [vmem:[#allocation5 + $0x68] sm:$0xff]
    %v61 = vld [vmem:[#allocation5 + $0x70] sm:$0xff]
    %v62 = vld [vmem:[#allocation5 + $0x78] sm:$0xff]
    %v63 = vld [vmem:[#allocation5 + $0x80] sm:$0xff]
    %v64 = vld [vmem:[#allocation5 + $0x88] sm:$0xff]
    %v65 = vld [vmem:[#allocation5 + $0x90] sm:$0xff]
    %v66 = vld [vmem:[#allocation5 + $0x98] sm:$0xff]
    %v67 = vld [vmem:[#allocation5 + $0xa0] sm:$0xff]
    %v68 = vld [vmem:[#allocation5 + $0xa8] sm:$0xff]
    %v69 = vld [vmem:[#allocation5 + $0xb0] sm:$0xff]
    %v70 = vld [vmem:[#allocation5 + $0xb8] sm:$0xff]
    %v71 = vld [vmem:[#allocation5 + $0xc0] sm:$0xff]
    %v72 = vld [vmem:[#allocation5 + $0xc8] sm:$0xff]
    %v73 = vld [vmem:[#allocation5 + $0xd0] sm:$0xff]
    %v74 = vld [vmem:[#allocation5 + $0xd8] sm:$0xff]
    %v75 = vld [vmem:[#allocation5 + $0xe0] sm:$0xff]
    %v76 = vld [vmem:[#allocation5 + $0xe8] sm:$0xff]
    %v77 = vld [vmem:[#allocation5 + $0xf0] sm:$0xff]
    %v78 = vld [vmem:[#allocation5 + $0xf8] sm:$0xff]
    %v79 = vld [vmem:[#allocation5 + $0x100] sm:$0xff]
    %v80 = vld [vmem:[#allocation5 + $0x108] sm:$0xff]
    %v81 = vld [vmem:[#allocation5 + $0x110] sm:$0xff]
    %v82 = vld [vmem:[#allocation5 + $0x118] sm:$0xff]
    %v83 = vld [vmem:[#allocation5 + $0x120] sm:$0xff]
    %v84 = vld [vmem:[#allocation5 + $0x128] sm:$0xff]
    %v85 = vld [vmem:[#allocation5 + $0x130] sm:$0xff]
    %v86 = vld [vmem:[#allocation5 + $0x138] sm:$0xff]
    %v87 = vld [vmem:[#allocation7] sm:$0x1f]
    %v88 = vlaneseq
    %v89 = vshrl.u32 %v88, 7
    %v90 = vsub.s32 0, %v89
    %v91 = vrot.slane %v87, %v90
    %vm92 = vcmask 130048
    %v94 = vsel %vm92, %v52, 0
    %96 = vmatprep.subr.mxu0 0.0
    %97 = vmatpush1.msra.mxu0 0.0
    %98 = vmatprep.subr.mxu0 0.0
    %99 = vmatpush1.msra.mxu0 0.0
    %100 = vmatprep.subr.mxu0 0.0
    %101 = vmatpush1.msra.mxu0 0.0
    %102 = vmatprep.subr.mxu0 0.0
    %103 = vmatpush1.msra.mxu0 0.0
    %104 = vmatprep.subr.mxu0 0.0
    %105 = vmatpush1.msra.mxu0 0.0
    %106 = vmatprep.subr.mxu0 0.0
    %107 = vmatpush1.msra.mxu0 0.0
    %108 = vmatprep.subr.mxu0 0.0
    %109 = vmatpush1.msra.mxu0 0.0
    %110 = vmatprep.subr.mxu0 0.0
    %111 = vmatpush1.msra.mxu0 0.0
    %112 = vmatprep.subr.mxu0 0.0
    %113 = vmatpush1.msra.mxu0 0.0
    %114 = vmatprep.subr.mxu0 0.0
    %115 = vmatpush1.msra.mxu0 0.0
    %116 = vmatprep.subr.mxu0 0.0
    %117 = vmatpush1.msra.mxu0 0.0
    %118 = vmatprep.subr.mxu0 0.0
    %119 = vmatpush1.msra.mxu0 0.0
    %120 = vmatprep.subr.mxu0 0.0
    %121 = vmatpush1.msra.mxu0 0.0
    %122 = vmatprep.subr.mxu0 0.0
    %123 = vmatpush1.msra.mxu0 0.0
    %124 = vmatprep.subr.mxu0 0.0
    %125 = vmatpush1.msra.mxu0 %v54
    %126 = vmatprep.subr.mxu0 0.0
    %127 = vmatpush1.msra.mxu0 %v53
    %128 = vmatprep.subr.mxu0 0.0
    %129 = vmatpush2.msra.mxu0 0.0
    %130 = vmatprep.subr.mxu0 0.0
    %131 = vmatpush2.msra.mxu0 0.0
    %132 = vmatprep.subr.mxu0 0.0
    %133 = vmatpush2.msra.mxu0 0.0
    %134 = vmatprep.subr.mxu0 0.0
    %135 = vmatpush2.msra.mxu0 0.0
    %136 = vmatprep.subr.mxu0 0.0
    %137 = vmatpush2.msra.mxu0 0.0
    %138 = vmatprep.subr.mxu0 0.0
    %139 = vmatpush2.msra.mxu0 0.0
    %140 = vmatprep.subr.mxu0 0.0
    %141 = vmatpush2.msra.mxu0 0.0
    %142 = vmatprep.subr.mxu0 0.0
    %143 = vmatpush2.msra.mxu0 0.0
    %144 = vmatprep.subr.mxu0 0.0
    %145 = vmatpush2.msra.mxu0 0.0
    %146 = vmatprep.subr.mxu0 0.0
    %147 = vmatpush2.msra.mxu0 0.0
    %148 = vmatprep.subr.mxu0 0.0
    %149 = vmatpush2.msra.mxu0 0.0
    %150 = vmatprep.subr.mxu0 0.0
    %151 = vmatpush2.msra.mxu0 0.0
    %152 = vmatprep.subr.mxu0 0.0
    %153 = vmatpush2.msra.mxu0 0.0
    %154 = vmatprep.subr.mxu0 0.0
    %155 = vmatpush2.msra.mxu0 0.0
    %156 = vmatprep.subr.mxu0 0.0
    %157 = vmatpush2.msra.mxu0 0.0
    %158 = vmatprep.subr.mxu0 0.0
    %159 = vmatpush2.msra.mxu0 0.0
    %160 = vmatprep.mubr.f32.mxu0 0.0
    %161 = vmatmul.mubr.f32.gmra.mxu0 %v94
    %v162 = vpop.f32.mrf.mxu0
    %v163 = vadd.f32 %v91, %v162
    %v164 = vpop.f32.mrf.mxu0
    %165 = vdwg.mxu0
    %v166 = vmax.f32 %v163, 0.0
    %v167 = vlaneseq
    %v168 = vshrl.u32 %v167, 7
    %v169 = vsub.s32 1, %v168
    %v170 = vrot.slane %v87, %v169
    %vm171 = vcmask 523264
    %v173 = vsel %vm171, %v166, 0
    %175 = vmatprep.subr.mxu0 0.0
    %176 = vmatpush1.msra.mxu0 0.0
    %177 = vmatprep.subr.mxu0 0.0
    %178 = vmatpush1.msra.mxu0 0.0
    %179 = vmatprep.subr.mxu0 0.0
    %180 = vmatpush1.msra.mxu0 0.0
    %181 = vmatprep.subr.mxu0 0.0
    %182 = vmatpush1.msra.mxu0 0.0
    %183 = vmatprep.subr.mxu0 0.0
    %184 = vmatpush1.msra.mxu0 0.0
    %185 = vmatprep.subr.mxu0 0.0
    %186 = vmatpush1.msra.mxu0 0.0
    %187 = vmatprep.subr.mxu0 0.0
    %188 = vmatpush1.msra.mxu0 0.0
    %189 = vmatprep.subr.mxu0 0.0
    %190 = vmatpush1.msra.mxu0 0.0
    %191 = vmatprep.subr.mxu0 0.0
    %192 = vmatpush1.msra.mxu0 %v62
    %193 = vmatprep.subr.mxu0 0.0
    %194 = vmatpush1.msra.mxu0 %v61
    %195 = vmatprep.subr.mxu0 0.0
    %196 = vmatpush1.msra.mxu0 %v60
    %197 = vmatprep.subr.mxu0 0.0
    %198 = vmatpush1.msra.mxu0 %v59
    %199 = vmatprep.subr.mxu0 0.0
    %200 = vmatpush1.msra.mxu0 %v58
    %201 = vmatprep.subr.mxu0 0.0
    %202 = vmatpush1.msra.mxu0 %v57
    %203 = vmatprep.subr.mxu0 0.0
    %204 = vmatpush1.msra.mxu0 %v56
    %205 = vmatprep.subr.mxu0 0.0
    %206 = vmatpush1.msra.mxu0 %v55
    %207 = vmatprep.subr.mxu0 0.0
    %208 = vmatpush2.msra.mxu0 0.0
    %209 = vmatprep.subr.mxu0 0.0
    %210 = vmatpush2.msra.mxu0 0.0
    %211 = vmatprep.subr.mxu0 0.0
    %212 = vmatpush2.msra.mxu0 0.0
    %213 = vmatprep.subr.mxu0 0.0
    %214 = vmatpush2.msra.mxu0 0.0
    %215 = vmatprep.subr.mxu0 0.0
    %216 = vmatpush2.msra.mxu0 0.0
    %217 = vmatprep.subr.mxu0 0.0
    %218 = vmatpush2.msra.mxu0 0.0
    %219 = vmatprep.subr.mxu0 0.0
    %220 = vmatpush2.msra.mxu0 0.0
    %221 = vmatprep.subr.mxu0 0.0
    %222 = vmatpush2.msra.mxu0 0.0
    %223 = vmatprep.subr.mxu0 0.0
    %224 = vmatpush2.msra.mxu0 0.0
    %225 = vmatprep.subr.mxu0 0.0
    %226 = vmatpush2.msra.mxu0 0.0
    %227 = vmatprep.subr.mxu0 0.0
    %228 = vmatpush2.msra.mxu0 0.0
    %229 = vmatprep.subr.mxu0 0.0
    %230 = vmatpush2.msra.mxu0 0.0
    %231 = vmatprep.subr.mxu0 0.0
    %232 = vmatpush2.msra.mxu0 0.0
    %233 = vmatprep.subr.mxu0 0.0
    %234 = vmatpush2.msra.mxu0 0.0
    %235 = vmatprep.subr.mxu0 0.0
    %236 = vmatpush2.msra.mxu0 0.0
    %237 = vmatprep.subr.mxu0 0.0
    %238 = vmatpush2.msra.mxu0 0.0
    %239 = vmatprep.mubr.f32.mxu0 0.0
    %240 = vmatmul.mubr.f32.gmra.mxu0 %v173
    %v241 = vpop.f32.mrf.mxu0
    %v242 = vadd.f32 %v170, %v241
    %v243 = vpop.f32.mrf.mxu0
    %244 = vdwg.mxu0
    %v245 = vmax.f32 %v242, 0.0
    %v246 = vlaneseq
    %v247 = vshrl.u32 %v246, 7
    %v248 = vsub.s32 2, %v247
    %v249 = vrot.slane %v87, %v248
    %v251 = vsel %vm171, %v245, 0
    %253 = vmatprep.subr.mxu0 0.0
    %254 = vmatpush1.msra.mxu0 0.0
    %255 = vmatprep.subr.mxu0 0.0
    %256 = vmatpush1.msra.mxu0 0.0
    %257 = vmatprep.subr.mxu0 0.0
    %258 = vmatpush1.msra.mxu0 0.0
    %259 = vmatprep.subr.mxu0 0.0
    %260 = vmatpush1.msra.mxu0 0.0
    %261 = vmatprep.subr.mxu0 0.0
    %262 = vmatpush1.msra.mxu0 0.0
    %263 = vmatprep.subr.mxu0 0.0
    %264 = vmatpush1.msra.mxu0 0.0
    %265 = vmatprep.subr.mxu0 0.0
    %266 = vmatpush1.msra.mxu0 0.0
    %267 = vmatprep.subr.mxu0 0.0
    %268 = vmatpush1.msra.mxu0 0.0
    %269 = vmatprep.subr.mxu0 0.0
    %270 = vmatpush1.msra.mxu0 %v70
    %271 = vmatprep.subr.mxu0 0.0
    %272 = vmatpush1.msra.mxu0 %v69
    %273 = vmatprep.subr.mxu0 0.0
    %274 = vmatpush1.msra.mxu0 %v68
    %275 = vmatprep.subr.mxu0 0.0
    %276 = vmatpush1.msra.mxu0 %v67
    %277 = vmatprep.subr.mxu0 0.0
    %278 = vmatpush1.msra.mxu0 %v66
    %279 = vmatprep.subr.mxu0 0.0
    %280 = vmatpush1.msra.mxu0 %v65
    %281 = vmatprep.subr.mxu0 0.0
    %282 = vmatpush1.msra.mxu0 %v64
    %283 = vmatprep.subr.mxu0 0.0
    %284 = vmatpush1.msra.mxu0 %v63
    %285 = vmatprep.subr.mxu0 0.0
    %286 = vmatpush2.msra.mxu0 0.0
    %287 = vmatprep.subr.mxu0 0.0
    %288 = vmatpush2.msra.mxu0 0.0
    %289 = vmatprep.subr.mxu0 0.0
    %290 = vmatpush2.msra.mxu0 0.0
    %291 = vmatprep.subr.mxu0 0.0
    %292 = vmatpush2.msra.mxu0 0.0
    %293 = vmatprep.subr.mxu0 0.0
    %294 = vmatpush2.msra.mxu0 0.0
    %295 = vmatprep.subr.mxu0 0.0
    %296 = vmatpush2.msra.mxu0 0.0
    %297 = vmatprep.subr.mxu0 0.0
    %298 = vmatpush2.msra.mxu0 0.0
    %299 = vmatprep.subr.mxu0 0.0
    %300 = vmatpush2.msra.mxu0 0.0
    %301 = vmatprep.subr.mxu0 0.0
    %302 = vmatpush2.msra.mxu0 0.0
    %303 = vmatprep.subr.mxu0 0.0
    %304 = vmatpush2.msra.mxu0 0.0
    %305 = vmatprep.subr.mxu0 0.0
    %306 = vmatpush2.msra.mxu0 0.0
    %307 = vmatprep.subr.mxu0 0.0
    %308 = vmatpush2.msra.mxu0 0.0
    %309 = vmatprep.subr.mxu0 0.0
    %310 = vmatpush2.msra.mxu0 0.0
    %311 = vmatprep.subr.mxu0 0.0
    %312 = vmatpush2.msra.mxu0 0.0
    %313 = vmatprep.subr.mxu0 0.0
    %314 = vmatpush2.msra.mxu0 0.0
    %315 = vmatprep.subr.mxu0 0.0
    %316 = vmatpush2.msra.mxu0 0.0
    %317 = vmatprep.mubr.f32.mxu0 0.0
    %318 = vmatmul.mubr.f32.gmra.mxu0 %v251
    %v319 = vpop.f32.mrf.mxu0
    %v320 = vadd.f32 %v249, %v319
    %v321 = vpop.f32.mrf.mxu0
    %322 = vdwg.mxu0
    %v323 = vmax.f32 %v320, 0.0
    %v324 = vlaneseq
    %v325 = vshrl.u32 %v324, 7
    %v326 = vsub.s32 3, %v325
    %v327 = vrot.slane %v87, %v326
    %v329 = vsel %vm171, %v323, 0
    %331 = vmatprep.subr.mxu0 0.0
    %332 = vmatpush1.msra.mxu0 0.0
    %333 = vmatprep.subr.mxu0 0.0
    %334 = vmatpush1.msra.mxu0 0.0
    %335 = vmatprep.subr.mxu0 0.0
    %336 = vmatpush1.msra.mxu0 0.0
    %337 = vmatprep.subr.mxu0 0.0
    %338 = vmatpush1.msra.mxu0 0.0
    %339 = vmatprep.subr.mxu0 0.0
    %340 = vmatpush1.msra.mxu0 0.0
    %341 = vmatprep.subr.mxu0 0.0
    %342 = vmatpush1.msra.mxu0 0.0
    %343 = vmatprep.subr.mxu0 0.0
    %344 = vmatpush1.msra.mxu0 0.0
    %345 = vmatprep.subr.mxu0 0.0
    %346 = vmatpush1.msra.mxu0 0.0
    %347 = vmatprep.subr.mxu0 0.0
    %348 = vmatpush1.msra.mxu0 %v78
    %349 = vmatprep.subr.mxu0 0.0
    %350 = vmatpush1.msra.mxu0 %v77
    %351 = vmatprep.subr.mxu0 0.0
    %352 = vmatpush1.msra.mxu0 %v76
    %353 = vmatprep.subr.mxu0 0.0
    %354 = vmatpush1.msra.mxu0 %v75
    %355 = vmatprep.subr.mxu0 0.0
    %356 = vmatpush1.msra.mxu0 %v74
    %357 = vmatprep.subr.mxu0 0.0
    %358 = vmatpush1.msra.mxu0 %v73
    %359 = vmatprep.subr.mxu0 0.0
    %360 = vmatpush1.msra.mxu0 %v72
    %361 = vmatprep.subr.mxu0 0.0
    %362 = vmatpush1.msra.mxu0 %v71
    %363 = vmatprep.subr.mxu0 0.0
    %364 = vmatpush2.msra.mxu0 0.0
    %365 = vmatprep.subr.mxu0 0.0
    %366 = vmatpush2.msra.mxu0 0.0
    %367 = vmatprep.subr.mxu0 0.0
    %368 = vmatpush2.msra.mxu0 0.0
    %369 = vmatprep.subr.mxu0 0.0
    %370 = vmatpush2.msra.mxu0 0.0
    %371 = vmatprep.subr.mxu0 0.0
    %372 = vmatpush2.msra.mxu0 0.0
    %373 = vmatprep.subr.mxu0 0.0
    %374 = vmatpush2.msra.mxu0 0.0
    %375 = vmatprep.subr.mxu0 0.0
    %376 = vmatpush2.msra.mxu0 0.0
    %377 = vmatprep.subr.mxu0 0.0
    %378 = vmatpush2.msra.mxu0 0.0
    %379 = vmatprep.subr.mxu0 0.0
    %380 = vmatpush2.msra.mxu0 0.0
    %381 = vmatprep.subr.mxu0 0.0
    %382 = vmatpush2.msra.mxu0 0.0
    %383 = vmatprep.subr.mxu0 0.0
    %384 = vmatpush2.msra.mxu0 0.0
    %385 = vmatprep.subr.mxu0 0.0
    %386 = vmatpush2.msra.mxu0 0.0
    %387 = vmatprep.subr.mxu0 0.0
    %388 = vmatpush2.msra.mxu0 0.0
    %389 = vmatprep.subr.mxu0 0.0
    %390 = vmatpush2.msra.mxu0 0.0
    %391 = vmatprep.subr.mxu0 0.0
    %392 = vmatpush2.msra.mxu0 0.0
    %393 = vmatprep.subr.mxu0 0.0
    %394 = vmatpush2.msra.mxu0 0.0
    %395 = vmatprep.mubr.f32.mxu0 0.0
    %396 = vmatmul.mubr.f32.gmra.mxu0 %v329
    %v397 = vpop.f32.mrf.mxu0
    %v398 = vadd.f32 %v327, %v397
    %v399 = vpop.f32.mrf.mxu0
    %400 = vdwg.mxu0
    %v401 = vmax.f32 %v398, 0.0
    %v402 = vlaneseq
    %v403 = vshrl.u32 %v402, 7
    %v404 = vsub.s32 4, %v403
    %v405 = vrot.slane %v87, %v404
    %v407 = vsel %vm171, %v401, 0
    %409 = vmatprep.subr.mxu0 0.0
    %410 = vmatpush1.msra.mxu0 0.0
    %411 = vmatprep.subr.mxu0 0.0
    %412 = vmatpush1.msra.mxu0 0.0
    %413 = vmatprep.subr.mxu0 0.0
    %414 = vmatpush1.msra.mxu0 0.0
    %415 = vmatprep.subr.mxu0 0.0
    %416 = vmatpush1.msra.mxu0 0.0
    %417 = vmatprep.subr.mxu0 0.0
    %418 = vmatpush1.msra.mxu0 0.0
    %419 = vmatprep.subr.mxu0 0.0
    %420 = vmatpush1.msra.mxu0 0.0
    %421 = vmatprep.subr.mxu0 0.0
    %422 = vmatpush1.msra.mxu0 0.0
    %423 = vmatprep.subr.mxu0 0.0
    %424 = vmatpush1.msra.mxu0 0.0
    %425 = vmatprep.subr.mxu0 0.0
    %426 = vmatpush1.msra.mxu0 %v86
    %427 = vmatprep.subr.mxu0 0.0
    %428 = vmatpush1.msra.mxu0 %v85
    %429 = vmatprep.subr.mxu0 0.0
    %430 = vmatpush1.msra.mxu0 %v84
    %431 = vmatprep.subr.mxu0 0.0
    %432 = vmatpush1.msra.mxu0 %v83
    %433 = vmatprep.subr.mxu0 0.0
    %434 = vmatpush1.msra.mxu0 %v82
    %435 = vmatprep.subr.mxu0 0.0
    %436 = vmatpush1.msra.mxu0 %v81
    %437 = vmatprep.subr.mxu0 0.0
    %438 = vmatpush1.msra.mxu0 %v80
    %439 = vmatprep.subr.mxu0 0.0
    %440 = vmatpush1.msra.mxu0 %v79
    %441 = vmatprep.subr.mxu0 0.0
    %442 = vmatpush2.msra.mxu0 0.0
    %443 = vmatprep.subr.mxu0 0.0
    %444 = vmatpush2.msra.mxu0 0.0
    %445 = vmatprep.subr.mxu0 0.0
    %446 = vmatpush2.msra.mxu0 0.0
    %447 = vmatprep.subr.mxu0 0.0
    %448 = vmatpush2.msra.mxu0 0.0
    %449 = vmatprep.subr.mxu0 0.0
    %450 = vmatpush2.msra.mxu0 0.0
    %451 = vmatprep.subr.mxu0 0.0
    %452 = vmatpush2.msra.mxu0 0.0
    %453 = vmatprep.subr.mxu0 0.0
    %454 = vmatpush2.msra.mxu0 0.0
    %455 = vmatprep.subr.mxu0 0.0
    %456 = vmatpush2.msra.mxu0 0.0
    %457 = vmatprep.subr.mxu0 0.0
    %458 = vmatpush2.msra.mxu0 0.0
    %459 = vmatprep.subr.mxu0 0.0
    %460 = vmatpush2.msra.mxu0 0.0
    %461 = vmatprep.subr.mxu0 0.0
    %462 = vmatpush2.msra.mxu0 0.0
    %463 = vmatprep.subr.mxu0 0.0
    %464 = vmatpush2.msra.mxu0 0.0
    %465 = vmatprep.subr.mxu0 0.0
    %466 = vmatpush2.msra.mxu0 0.0
    %467 = vmatprep.subr.mxu0 0.0
    %468 = vmatpush2.msra.mxu0 0.0
    %469 = vmatprep.subr.mxu0 0.0
    %470 = vmatpush2.msra.mxu0 0.0
    %471 = vmatprep.subr.mxu0 0.0
    %472 = vmatpush2.msra.mxu0 0.0
    %473 = vmatprep.mubr.f32.mxu0 0.0
    %474 = vmatmul.mubr.f32.gmra.mxu0 %v407
    %v475 = vpop.f32.mrf.mxu0
    %v476 = vadd.f32 %v405, %v475
    %v477 = vpop.f32.mrf.mxu0
    %478 = vdwg.mxu0
    %v479 = vlaneseq
    %v480 = vand.u32 %v479, 127
    %vm481 = vcmp.lt.s32.totalorder %v480, 16
    %v482 = vtanh.pop %v476
    %v483 = vsel %vm481, %v482, %v476
    %vm484 = vcmask 261120
    %485 = vst.msk [vmem:[#allocation8] sm:$0xff] %vm484, %v483
    // Predicated region
    $region26: #{tpu_custom_call.1} parent=1 // pred_check
      _
    $region27: #{tpu_custom_call.1} parent=1 // pred_check_branch
      %487 = sbr.rel (0) target = $region29
    $region28: #{tpu_custom_call.1} parent=1 // pred_region
      %s489 = ssub.s32 128, 128
      %490 = vsyncadd [#allocation4], %s489
      %s492 = sshll.u32 [#allocation8], 4
      %s493 = int_to_ptr.vmem [resolvable:$true] %s492
      %495 = dma.vmem_to_hbm [thread:$0]  %s493, 128, %s3, [#allocation4]
    $region29: #{tpu_custom_call.1} parent=1 // pred_fallthru
      _
    // Predicated region
    $region30: #{tpu_custom_call.1} parent=1 // pred_check
      _
    $region31: #{tpu_custom_call.1} parent=1 // pred_check_branch
      %497 = sbr.rel (0) target = $region33
    $region32: #{tpu_custom_call.1} parent=1 // pred_region
      %498 = dma.done [#allocation4], 128
    $region33: #{tpu_custom_call.1} parent=1 // pred_fallthru
      _
    %499 = vsyncpa [#allocation3], 1
    %500 = vsyncpa [#allocation6], 1
    %501 = vsyncpa [#allocation4], 1

</llo_original>
